<compile_context>
chip_gen: v5e
topology: v5e:2x2
jax: 0.10.0
libtpu: 0.0.40
codegen_flags: <defaults>
</compile_context>

<pallas_src>
import functools

import numpy as np

import jax
import jax.numpy as jnp
from jax import lax
from jax.experimental import pallas as pl
from jax.experimental.pallas import tpu as pltpu


# ----------------------------------------------------------------------------
# Kernel: one lane block (a group of whole images) per grid step.
#   1x1 expand conv (+folded BN, +bias, +ReLU)
#   -> 3x3 depthwise conv (+folded BN, +bias, +ReLU)
#   -> 1x1 project conv (+folded BN, +bias)
#   -> optional residual add.
# All activations live as (channels, lanes) values, lanes = imgs*H*W.
# ----------------------------------------------------------------------------
def _inverted_residual_kernel(x_ref, w1_ref, b12_ref, wd_ref, mask_ref,
                              w3_ref, b3_ref, *rest,
                              W, stride, use_res_connect):
    if stride == 2:
        pick_ref, out_ref = rest
    else:
        (out_ref,) = rest

    L = x_ref.shape[1]                                   # lanes per block

    x = x_ref[...]                                       # (Cin, L)
    xb = x.astype(jnp.bfloat16)

    # ---- 1x1 expand conv (MXU; BN scale already folded into w1) + ReLU ----
    h = jnp.dot(w1_ref[...], xb, preferred_element_type=jnp.float32)
    h = jnp.maximum(h + b12_ref[:, 0:1], 0.0)            # (Ce, L) f32

    # ---- 3x3 depthwise conv: lane rolls (XLU) + resident border masks -----
    acc = h * wd_ref[:, 4:5]                             # center tap, no mask
    m = 0
    for ky in range(3):
        dy = ky - 1
        for kx in range(3):
            dx = kx - 1
            if dy == 0 and dx == 0:
                continue
            off = dy * W + dx
            # tap[:, p] = h[:, p + off]; pltpu.roll follows jnp.roll
            # (out[j] = in[(j - shift) mod L]) => shift = (-off) mod L.
            tap = pltpu.roll(h, (-off) % L, 1)
            acc = acc + (tap * mask_ref[m:m + 1, :]) \
                        * wd_ref[:, ky * 3 + kx:ky * 3 + kx + 1]
            m += 1
    a = jnp.maximum(acc + b12_ref[:, 1:2], 0.0)          # (Ce, L) f32

    ab = a.astype(jnp.bfloat16)
    if stride == 2:
        # stride-2 depthwise == stride-1 result sampled at even (y, x);
        # subsample with a precomputed 0/1 selection matmul on the MXU.
        ab = jnp.dot(ab, pick_ref[...],
                     preferred_element_type=jnp.float32).astype(jnp.bfloat16)

    # ---- 1x1 project conv (MXU; BN scale folded into w3) + bias ------------
    y = jnp.dot(w3_ref[...], ab, preferred_element_type=jnp.float32)
    y = y + b3_ref[...]                                  # (Cout, Lo)
    if use_res_connect:
        y = y + x.astype(jnp.float32)                    # x is f32 on this path
    out_ref[...] = y.astype(out_ref.dtype)


# ----------------------------------------------------------------------------
# Host-side constant builders (hoisted out of the kernel).
# ----------------------------------------------------------------------------
def _make_tap_masks(imgs, H, W):
    """(8, imgs*H*W) f32 validity masks, one row per non-center 3x3 tap."""
    HW = H * W
    p = np.arange(imgs * HW)
    y = (p % HW) // W
    x = p % W
    rows = []
    for ky in range(3):
        dy = ky - 1
        for kx in range(3):
            dx = kx - 1
            if dy == 0 and dx == 0:
                continue
            valid = np.ones(p.shape, dtype=bool)
            if dy == -1:
                valid &= (y >= 1)
            elif dy == 1:
                valid &= (y <= H - 2)
            if dx == -1:
                valid &= (x >= 1)
            elif dx == 1:
                valid &= (x <= W - 2)
            rows.append(valid)
    return jnp.asarray(np.stack(rows).astype(np.float32))


def _make_pick(imgs, H, W, Ho, Wo, stride):
    """0/1 selection matrix (imgs*H*W, imgs*Ho*Wo) subsampling at even (y,x)."""
    HW, HWo = H * W, Ho * Wo
    rows = np.arange(imgs * HW)[:, None]
    cols = np.arange(imgs * HWo)[None, :]
    img = cols // HWo
    yo = (cols % HWo) // Wo
    xo = cols % Wo
    src = img * HW + (yo * stride) * W + xo * stride
    return jnp.asarray((rows == src).astype(np.float32)).astype(jnp.bfloat16)


def _pick_imgs_per_step(N, HW, HWo, target_lanes=512, max_lanes=8192):
    """Images per grid step (lanes = imgs*HW). Prefer >=target_lanes lanes to
    amortize per-step overhead; blocks must cover whole images and, when the
    grid has >1 step, both lane tiles must be multiples of 128 (lane-dense
    stores / BlockSpec divisibility)."""
    divisors = [d for d in range(1, N + 1) if N % d == 0]

    def ok(d):
        if d == N:
            return True
        return (d * HW) % 128 == 0 and (d * HWo) % 128 == 0

    good = [d for d in divisors if ok(d)]
    for d in good:
        if target_lanes <= d * HW <= max_lanes:
            return d
    fits = [d for d in good if d * HW <= max_lanes]
    return fits[-1] if fits else N


def _vmem_limit_bytes():
    # Size scoped VMEM against the actual chip (v7x: 64 MiB, v5e/v6e: 128 MiB).
    try:
        cap = int(pltpu.get_tpu_info().vmem_capacity_bytes)
    except Exception:
        cap = 64 * 1024 * 1024
    return max(16 * 1024 * 1024, min(cap // 2, 64 * 1024 * 1024))


# ----------------------------------------------------------------------------
# Wrapper: NCHW in, NCHW out.  Channel-major layout with lanes = batch*spatial.
# ----------------------------------------------------------------------------
def inverted_residual_conv(x_nchw, params, *, stride, use_res_connect):
    w1, s1, b1, wd, s2, b2, w3, s3, b3 = params
    N, Cin, H, W = x_nchw.shape
    Ce, Cout = w1.shape[0], w3.shape[0]
    HW = H * W
    Ho = (H + 2 - 3) // stride + 1
    Wo = (W + 2 - 3) // stride + 1
    HWo = Ho * Wo
    assert not (use_res_connect and (stride != 1 or Cin != Cout))

    imgs = _pick_imgs_per_step(N, HW, HWo)
    L, Lo = imgs * HW, imgs * HWo
    n_steps = N // imgs

    # Fold eval-mode BN scales into the weights; only biases remain in-kernel.
    w1f = (w1 * s1).astype(jnp.bfloat16)                 # (Ce, Cin)
    wdf = (wd * s2).astype(jnp.float32)                  # (Ce, 9)
    w3f = (w3 * s3).astype(jnp.bfloat16)                 # (Cout, Ce)
    b12 = jnp.concatenate([b1, b2], axis=1).astype(jnp.float32)   # (Ce, 2)
    b3f = b3.astype(jnp.float32)                         # (Cout, 1)

    masks = _make_tap_masks(imgs, H, W)                  # (8, L) resident

    # Residual path needs f32 x in-kernel; otherwise bf16 halves the input DMA.
    x_dtype = jnp.float32 if use_res_connect else jnp.bfloat16
    x = jnp.transpose(x_nchw, (1, 0, 2, 3)).reshape(Cin, N * HW).astype(x_dtype)

    args = [x, w1f, b12, wdf, masks, w3f, b3f]
    in_specs = [
        pl.BlockSpec((Cin, L), lambda i: (0, i)),
        pl.BlockSpec((Ce, Cin), lambda i: (0, 0)),       # resident weights
        pl.BlockSpec((Ce, 2), lambda i: (0, 0)),
        pl.BlockSpec((Ce, 9), lambda i: (0, 0)),
        pl.BlockSpec((8, L), lambda i: (0, 0)),
        pl.BlockSpec((Cout, Ce), lambda i: (0, 0)),
        pl.BlockSpec((Cout, 1), lambda i: (0, 0)),
    ]
    if stride == 2:
        pick = _make_pick(imgs, H, W, Ho, Wo, stride)    # (L, Lo) bf16 resident
        args.append(pick)
        in_specs.append(pl.BlockSpec((L, Lo), lambda i: (0, 0)))

    kernel = functools.partial(_inverted_residual_kernel, W=W, stride=stride,
                               use_res_connect=use_res_connect)

    flops = (2 * Cin * Ce * N * HW + 2 * 9 * Ce * N * HW
             + 2 * Ce * Cout * N * HWo)
    if stride == 2:
        flops += 2 * Ce * N * HW * Lo                    # selection matmul
    bytes_accessed = (sum(int(a.size) * a.dtype.itemsize for a in args)
                      + Cout * N * HWo * 4)

    out = pl.pallas_call(
        kernel,
        out_shape=jax.ShapeDtypeStruct((Cout, N * HWo), jnp.float32),
        grid_spec=pltpu.PrefetchScalarGridSpec(
            num_scalar_prefetch=0,
            grid=(n_steps,),
            in_specs=in_specs,
            out_specs=pl.BlockSpec((Cout, Lo), lambda i: (0, i)),
        ),
        compiler_params=pltpu.CompilerParams(
            dimension_semantics=("parallel",),
            vmem_limit_bytes=_vmem_limit_bytes()),
        cost_estimate=pl.CostEstimate(flops=flops, transcendentals=0,
                                      bytes_accessed=bytes_accessed),
    )(*args)

    return jnp.transpose(out.reshape(Cout, N, Ho, Wo), (1, 0, 2, 3))


def inverted_residual_forward(x, params, *, stride, inp, oup,
                              with_feature=True):
    """Mirrors InvertedResidual.forward (tuple/list bookkeeping)."""
    if isinstance(x, tuple):
        pre_acts, acts, x = x
    else:
        pre_acts, acts, x = [], [], x
    use_res_connect = (stride == 1 and inp == oup)
    y = inverted_residual_conv(x, params, stride=stride,
                               use_res_connect=use_res_connect)
    pre_acts.append(y)
    acts.append(y)
    if with_feature:
        return (pre_acts, acts, y)
    return y


# ----------------------------------------------------------------------------
# Deterministic parameter construction (synthetic weights, eval-mode BN).
# ----------------------------------------------------------------------------
def make_params(key, inp, oup, expand_ratio):
    Ce = inp * expand_ratio
    ks = jax.random.split(key, 6)
    eps = 1e-5

    w1 = jax.random.normal(ks[0], (Ce, inp), jnp.float32) * (1.0 / inp) ** 0.5
    wd = jax.random.normal(ks[1], (Ce, 9), jnp.float32) * (1.0 / 9.0) ** 0.5
    w3 = jax.random.normal(ks[2], (oup, Ce), jnp.float32) * (1.0 / Ce) ** 0.5

    def bn(k, c):
        g = 1.0 + 0.1 * jax.random.normal(k, (c, 1), jnp.float32)
        b = 0.05 * jax.random.normal(jax.random.fold_in(k, 1), (c, 1),
                                     jnp.float32)
        scale = g / jnp.sqrt(1.0 + eps)   # running_mean=0, running_var=1
        return scale, b

    s1, b1 = bn(ks[3], Ce)
    s2, b2 = bn(ks[4], Ce)
    s3, b3 = bn(ks[5], oup)
    return (w1, s1, b1, wd, s2, b2, w3, s3, b3)


# ----------------------------------------------------------------------------
# Pure-JAX reference (mirrors the kernel's folded-BN / bf16 matmul operands).
# ----------------------------------------------------------------------------
def reference_forward(x_nchw, params, *, stride, use_res_connect):
    w1, s1, b1, wd, s2, b2, w3, s3, b3 = params
    Ce = w1.shape[0]
    w1f = (w1 * s1).astype(jnp.bfloat16)
    wdf = (wd * s2).astype(jnp.float32)
    w3f = (w3 * s3).astype(jnp.bfloat16)
    x = jnp.transpose(x_nchw, (0, 2, 3, 1)).astype(jnp.float32)   # NHWC
    xb = x.astype(jnp.bfloat16)
    h = jnp.einsum('nhwc,ec->nhwe', xb, w1f, preferred_element_type=jnp.float32)
    h = jnp.maximum(h + b1[:, 0], 0.0)
    wd_hwio = wdf.reshape(Ce, 3, 3).transpose(1, 2, 0)[:, :, None, :]
    d = lax.conv_general_dilated(
        h, wd_hwio, window_strides=(stride, stride),
        padding=((1, 1), (1, 1)),
        dimension_numbers=('NHWC', 'HWIO', 'NHWC'),
        feature_group_count=Ce,
        precision=lax.Precision.HIGHEST)
    d = jnp.maximum(d + b2[:, 0], 0.0)
    y = jnp.einsum('nhwe,oe->nhwo', d.astype(jnp.bfloat16), w3f,
                   preferred_element_type=jnp.float32)
    y = y + b3[:, 0]
    if use_res_connect:
        y = y + x
    return jnp.transpose(y, (0, 3, 1, 2))


if __name__ == "__main__":
    key = jax.random.PRNGKey(0)
    kx1, kp1, kx2, kp2 = jax.random.split(key, 4)

    # Case 1: stride=1, inp == oup -> residual path active.
    N, INP, OUP, H, W = 2, 4, 4, 16, 16
    x1 = jax.random.normal(kx1, (N, INP, H, W), jnp.float32)
    p1 = make_params(kp1, INP, OUP, 2)
    pre_acts, acts, out1 = inverted_residual_forward(
        x1, p1, stride=1, inp=INP, oup=OUP, with_feature=True)
    out1 = jax.block_until_ready(out1)
    ref1 = reference_forward(x1, p1, stride=1, use_res_connect=True)
    assert out1.shape == ref1.shape == (N, OUP, H, W)
    # bf16 MXU operands -> bf16-level tolerance.
    assert jnp.allclose(out1, ref1, atol=3e-2, rtol=3e-2), \
        float(jnp.max(jnp.abs(out1 - ref1)))
    assert len(pre_acts) == 1 and len(acts) == 1

    # Case 2: stride=2, inp != oup -> no residual, spatial downsample.
    OUP2 = 8
    x2 = jax.random.normal(kx2, (N, INP, H, W), jnp.float32)
    p2 = make_params(kp2, INP, OUP2, 2)
    out2 = inverted_residual_forward(x2, p2, stride=2, inp=INP, oup=OUP2,
                                     with_feature=False)
    out2 = jax.block_until_ready(out2)
    ref2 = reference_forward(x2, p2, stride=2, use_res_connect=False)
    assert out2.shape == ref2.shape == (N, OUP2, H // 2, W // 2)
    assert jnp.allclose(out2, ref2, atol=3e-2, rtol=3e-2), \
        float(jnp.max(jnp.abs(out2 - ref2)))

    print("KERNEL_OK")
</pallas_src>

<mosaic_0001>
module attributes {stable_mosaic.version = 11 : i64} {
  func.func @_inverted_residual_kernel(%arg0: i32, %arg1: memref<4x512xf32, #tpu.memory_space<vmem>>, %arg2: memref<8x4xbf16, #tpu.memory_space<vmem>>, %arg3: memref<8x2xf32, #tpu.memory_space<vmem>>, %arg4: memref<8x9xf32, #tpu.memory_space<vmem>>, %arg5: memref<8x512xf32, #tpu.memory_space<vmem>>, %arg6: memref<4x8xbf16, #tpu.memory_space<vmem>>, %arg7: memref<4x1xf32, #tpu.memory_space<vmem>>, %arg8: memref<4x512xf32, #tpu.memory_space<vmem>>) attributes {dimension_semantics = [#tpu.dimension_semantics<parallel>], iteration_bounds = array<i64: 1>, scalar_prefetch = 0 : i64, scratch_operands = 0 : i64, tpu.core_type = #tpu.core_type<tc>, window_params = [{transform_indices = @transform_0, window_bounds = array<i64: 4, 512>}, {pipeline_mode = #tpu.pipeline_mode<synchronous>, transform_indices = @transform_1, window_bounds = array<i64: 8, 4>}, {pipeline_mode = #tpu.pipeline_mode<synchronous>, transform_indices = @transform_2, window_bounds = array<i64: 8, 2>}, {pipeline_mode = #tpu.pipeline_mode<synchronous>, transform_indices = @transform_3, window_bounds = array<i64: 8, 9>}, {pipeline_mode = #tpu.pipeline_mode<synchronous>, transform_indices = @transform_4, window_bounds = array<i64: 8, 512>}, {pipeline_mode = #tpu.pipeline_mode<synchronous>, transform_indices = @transform_5, window_bounds = array<i64: 4, 8>}, {pipeline_mode = #tpu.pipeline_mode<synchronous>, transform_indices = @transform_6, window_bounds = array<i64: 4, 1>}, {transform_indices = @transform_7, window_bounds = array<i64: 4, 512>}]} {
    %c0 = arith.constant 0 : index
    %c0_0 = arith.constant 0 : index
    %0 = vector.load %arg1[%c0, %c0_0] : memref<4x512xf32, #tpu.memory_space<vmem>>, vector<4x512xf32>
    %1 = arith.truncf %0 : vector<4x512xf32> to vector<4x512xbf16>
    %c0_1 = arith.constant 0 : index
    %c0_2 = arith.constant 0 : index
    %2 = vector.load %arg2[%c0_1, %c0_2] : memref<8x4xbf16, #tpu.memory_space<vmem>>, vector<8x4xbf16>
    %cst = arith.constant dense<0.000000e+00> : vector<8x512xf32>
    %3 = tpu.matmul %2, %1, %cst {dimension_numbers = #tpu.dot_dimension_numbers<[1], [0], [0], [1], [0, 0, 1, 1], [], []>} : vector<8x4xbf16>, vector<4x512xbf16>, vector<8x512xf32> -> vector<8x512xf32>
    %c0_3 = arith.constant 0 : index
    %c0_4 = arith.constant 0 : index
    %4 = vector.load %arg3[%c0_3, %c0_4] : memref<8x2xf32, #tpu.memory_space<vmem>>, vector<8x1xf32>
    %5 = vector.broadcast %4 : vector<8x1xf32> to vector<8x512xf32>
    %6 = arith.addf %3, %5 : vector<8x512xf32>
    %cst_5 = arith.constant 0.000000e+00 : f32
    %7 = vector.broadcast %cst_5 : f32 to vector<8x512xf32>
    %8 = arith.maximumf %6, %7 : vector<8x512xf32>
    %c0_6 = arith.constant 0 : index
    %c4 = arith.constant 4 : index
    %9 = vector.load %arg4[%c0_6, %c4] : memref<8x9xf32, #tpu.memory_space<vmem>>, vector<8x1xf32>
    %10 = vector.broadcast %9 : vector<8x1xf32> to vector<8x512xf32>
    %11 = arith.mulf %8, %10 : vector<8x512xf32>
    %c17_i32 = arith.constant 17 : i32
    %12 = tpu.dynamic_rotate %8 by %c17_i32 dim 1 : vector<8x512xf32>, i32 -> vector<8x512xf32>
    %c0_7 = arith.constant 0 : index
    %c0_8 = arith.constant 0 : index
    %13 = vector.load %arg5[%c0_7, %c0_8] : memref<8x512xf32, #tpu.memory_space<vmem>>, vector<1x512xf32>
    %14 = vector.broadcast %13 : vector<1x512xf32> to vector<8x512xf32>
    %15 = arith.mulf %12, %14 : vector<8x512xf32>
    %c0_9 = arith.constant 0 : index
    %c0_10 = arith.constant 0 : index
    %16 = vector.load %arg4[%c0_9, %c0_10] : memref<8x9xf32, #tpu.memory_space<vmem>>, vector<8x1xf32>
    %17 = vector.broadcast %16 : vector<8x1xf32> to vector<8x512xf32>
    %18 = arith.mulf %15, %17 : vector<8x512xf32>
    %19 = arith.addf %11, %18 : vector<8x512xf32>
    %c16_i32 = arith.constant 16 : i32
    %20 = tpu.dynamic_rotate %8 by %c16_i32 dim 1 : vector<8x512xf32>, i32 -> vector<8x512xf32>
    %c1 = arith.constant 1 : index
    %c0_11 = arith.constant 0 : index
    %21 = vector.load %arg5[%c1, %c0_11] : memref<8x512xf32, #tpu.memory_space<vmem>>, vector<1x512xf32>
    %22 = vector.broadcast %21 : vector<1x512xf32> to vector<8x512xf32>
    %23 = arith.mulf %20, %22 : vector<8x512xf32>
    %c0_12 = arith.constant 0 : index
    %c1_13 = arith.constant 1 : index
    %24 = vector.load %arg4[%c0_12, %c1_13] : memref<8x9xf32, #tpu.memory_space<vmem>>, vector<8x1xf32>
    %25 = vector.broadcast %24 : vector<8x1xf32> to vector<8x512xf32>
    %26 = arith.mulf %23, %25 : vector<8x512xf32>
    %27 = arith.addf %19, %26 : vector<8x512xf32>
    %c15_i32 = arith.constant 15 : i32
    %28 = tpu.dynamic_rotate %8 by %c15_i32 dim 1 : vector<8x512xf32>, i32 -> vector<8x512xf32>
    %c2 = arith.constant 2 : index
    %c0_14 = arith.constant 0 : index
    %29 = vector.load %arg5[%c2, %c0_14] : memref<8x512xf32, #tpu.memory_space<vmem>>, vector<1x512xf32>
    %30 = vector.broadcast %29 : vector<1x512xf32> to vector<8x512xf32>
    %31 = arith.mulf %28, %30 : vector<8x512xf32>
    %c0_15 = arith.constant 0 : index
    %c2_16 = arith.constant 2 : index
    %32 = vector.load %arg4[%c0_15, %c2_16] : memref<8x9xf32, #tpu.memory_space<vmem>>, vector<8x1xf32>
    %33 = vector.broadcast %32 : vector<8x1xf32> to vector<8x512xf32>
    %34 = arith.mulf %31, %33 : vector<8x512xf32>
    %35 = arith.addf %27, %34 : vector<8x512xf32>
    %c1_i32 = arith.constant 1 : i32
    %36 = tpu.dynamic_rotate %8 by %c1_i32 dim 1 : vector<8x512xf32>, i32 -> vector<8x512xf32>
    %c3 = arith.constant 3 : index
    %c0_17 = arith.constant 0 : index
    %37 = vector.load %arg5[%c3, %c0_17] : memref<8x512xf32, #tpu.memory_space<vmem>>, vector<1x512xf32>
    %38 = vector.broadcast %37 : vector<1x512xf32> to vector<8x512xf32>
    %39 = arith.mulf %36, %38 : vector<8x512xf32>
    %c0_18 = arith.constant 0 : index
    %c3_19 = arith.constant 3 : index
    %40 = vector.load %arg4[%c0_18, %c3_19] : memref<8x9xf32, #tpu.memory_space<vmem>>, vector<8x1xf32>
    %41 = vector.broadcast %40 : vector<8x1xf32> to vector<8x512xf32>
    %42 = arith.mulf %39, %41 : vector<8x512xf32>
    %43 = arith.addf %35, %42 : vector<8x512xf32>
    %c511_i32 = arith.constant 511 : i32
    %44 = tpu.dynamic_rotate %8 by %c511_i32 dim 1 : vector<8x512xf32>, i32 -> vector<8x512xf32>
    %c4_20 = arith.constant 4 : index
    %c0_21 = arith.constant 0 : index
    %45 = vector.load %arg5[%c4_20, %c0_21] : memref<8x512xf32, #tpu.memory_space<vmem>>, vector<1x512xf32>
    %46 = vector.broadcast %45 : vector<1x512xf32> to vector<8x512xf32>
    %47 = arith.mulf %44, %46 : vector<8x512xf32>
    %c0_22 = arith.constant 0 : index
    %c5 = arith.constant 5 : index
    %48 = vector.load %arg4[%c0_22, %c5] : memref<8x9xf32, #tpu.memory_space<vmem>>, vector<8x1xf32>
    %49 = vector.broadcast %48 : vector<8x1xf32> to vector<8x512xf32>
    %50 = arith.mulf %47, %49 : vector<8x512xf32>
    %51 = arith.addf %43, %50 : vector<8x512xf32>
    %c497_i32 = arith.constant 497 : i32
    %52 = tpu.dynamic_rotate %8 by %c497_i32 dim 1 : vector<8x512xf32>, i32 -> vector<8x512xf32>
    %c5_23 = arith.constant 5 : index
    %c0_24 = arith.constant 0 : index
    %53 = vector.load %arg5[%c5_23, %c0_24] : memref<8x512xf32, #tpu.memory_space<vmem>>, vector<1x512xf32>
    %54 = vector.broadcast %53 : vector<1x512xf32> to vector<8x512xf32>
    %55 = arith.mulf %52, %54 : vector<8x512xf32>
    %c0_25 = arith.constant 0 : index
    %c6 = arith.constant 6 : index
    %56 = vector.load %arg4[%c0_25, %c6] : memref<8x9xf32, #tpu.memory_space<vmem>>, vector<8x1xf32>
    %57 = vector.broadcast %56 : vector<8x1xf32> to vector<8x512xf32>
    %58 = arith.mulf %55, %57 : vector<8x512xf32>
    %59 = arith.addf %51, %58 : vector<8x512xf32>
    %c496_i32 = arith.constant 496 : i32
    %60 = tpu.dynamic_rotate %8 by %c496_i32 dim 1 : vector<8x512xf32>, i32 -> vector<8x512xf32>
    %c6_26 = arith.constant 6 : index
    %c0_27 = arith.constant 0 : index
    %61 = vector.load %arg5[%c6_26, %c0_27] : memref<8x512xf32, #tpu.memory_space<vmem>>, vector<1x512xf32>
    %62 = vector.broadcast %61 : vector<1x512xf32> to vector<8x512xf32>
    %63 = arith.mulf %60, %62 : vector<8x512xf32>
    %c0_28 = arith.constant 0 : index
    %c7 = arith.constant 7 : index
    %64 = vector.load %arg4[%c0_28, %c7] : memref<8x9xf32, #tpu.memory_space<vmem>>, vector<8x1xf32>
    %65 = vector.broadcast %64 : vector<8x1xf32> to vector<8x512xf32>
    %66 = arith.mulf %63, %65 : vector<8x512xf32>
    %67 = arith.addf %59, %66 : vector<8x512xf32>
    %c495_i32 = arith.constant 495 : i32
    %68 = tpu.dynamic_rotate %8 by %c495_i32 dim 1 : vector<8x512xf32>, i32 -> vector<8x512xf32>
    %c7_29 = arith.constant 7 : index
    %c0_30 = arith.constant 0 : index
    %69 = vector.load %arg5[%c7_29, %c0_30] : memref<8x512xf32, #tpu.memory_space<vmem>>, vector<1x512xf32>
    %70 = vector.broadcast %69 : vector<1x512xf32> to vector<8x512xf32>
    %71 = arith.mulf %68, %70 : vector<8x512xf32>
    %c0_31 = arith.constant 0 : index
    %c8 = arith.constant 8 : index
    %72 = vector.load %arg4[%c0_31, %c8] : memref<8x9xf32, #tpu.memory_space<vmem>>, vector<8x1xf32>
    %73 = vector.broadcast %72 : vector<8x1xf32> to vector<8x512xf32>
    %74 = arith.mulf %71, %73 : vector<8x512xf32>
    %75 = arith.addf %67, %74 : vector<8x512xf32>
    %c0_32 = arith.constant 0 : index
    %c1_33 = arith.constant 1 : index
    %76 = vector.load %arg3[%c0_32, %c1_33] : memref<8x2xf32, #tpu.memory_space<vmem>>, vector<8x1xf32>
    %77 = vector.broadcast %76 : vector<8x1xf32> to vector<8x512xf32>
    %78 = arith.addf %75, %77 : vector<8x512xf32>
    %cst_34 = arith.constant 0.000000e+00 : f32
    %79 = vector.broadcast %cst_34 : f32 to vector<8x512xf32>
    %80 = arith.maximumf %78, %79 : vector<8x512xf32>
    %81 = arith.truncf %80 : vector<8x512xf32> to vector<8x512xbf16>
    %c0_35 = arith.constant 0 : index
    %c0_36 = arith.constant 0 : index
    %82 = vector.load %arg6[%c0_35, %c0_36] : memref<4x8xbf16, #tpu.memory_space<vmem>>, vector<4x8xbf16>
    %cst_37 = arith.constant dense<0.000000e+00> : vector<4x512xf32>
    %83 = tpu.matmul %82, %81, %cst_37 {dimension_numbers = #tpu.dot_dimension_numbers<[1], [0], [0], [1], [0, 0, 1, 1], [], []>} : vector<4x8xbf16>, vector<8x512xbf16>, vector<4x512xf32> -> vector<4x512xf32>
    %c0_38 = arith.constant 0 : index
    %c0_39 = arith.constant 0 : index
    %84 = vector.load %arg7[%c0_38, %c0_39] : memref<4x1xf32, #tpu.memory_space<vmem>>, vector<4x1xf32>
    %85 = vector.broadcast %84 : vector<4x1xf32> to vector<4x512xf32>
    %86 = arith.addf %83, %85 : vector<4x512xf32>
    %87 = arith.addf %86, %0 : vector<4x512xf32>
    %c0_40 = arith.constant 0 : index
    %c0_41 = arith.constant 0 : index
    %88 = vector.load %arg8[%c0_40, %c0_41] : memref<4x512xf32, #tpu.memory_space<vmem>>, vector<4x512xf32>
    tpu.vector_store %arg8[%c0_40, %c0_41], %87 {strides = array<i32>} : memref<4x512xf32, #tpu.memory_space<vmem>>, vector<4x512xf32>,
    return
  }
  func.func @transform_0(%arg0: i32) -> (i32, i32) {
    %c0_i32 = arith.constant 0 : i32
    %c0_i32_0 = arith.constant 0 : i32
    return %c0_i32, %arg0 : i32, i32
  }
  func.func @transform_1(%arg0: i32) -> (i32, i32) {
    %c0_i32 = arith.constant 0 : i32
    %c0_i32_0 = arith.constant 0 : i32
    %c0_i32_1 = arith.constant 0 : i32
    return %c0_i32, %c0_i32_0 : i32, i32
  }
  func.func @transform_2(%arg0: i32) -> (i32, i32) {
    %c0_i32 = arith.constant 0 : i32
    %c0_i32_0 = arith.constant 0 : i32
    %c0_i32_1 = arith.constant 0 : i32
    return %c0_i32, %c0_i32_0 : i32, i32
  }
  func.func @transform_3(%arg0: i32) -> (i32, i32) {
    %c0_i32 = arith.constant 0 : i32
    %c0_i32_0 = arith.constant 0 : i32
    %c0_i32_1 = arith.constant 0 : i32
    return %c0_i32, %c0_i32_0 : i32, i32
  }
  func.func @transform_4(%arg0: i32) -> (i32, i32) {
    %c0_i32 = arith.constant 0 : i32
    %c0_i32_0 = arith.constant 0 : i32
    %c0_i32_1 = arith.constant 0 : i32
    return %c0_i32, %c0_i32_0 : i32, i32
  }
  func.func @transform_5(%arg0: i32) -> (i32, i32) {
    %c0_i32 = arith.constant 0 : i32
    %c0_i32_0 = arith.constant 0 : i32
    %c0_i32_1 = arith.constant 0 : i32
    return %c0_i32, %c0_i32_0 : i32, i32
  }
  func.func @transform_6(%arg0: i32) -> (i32, i32) {
    %c0_i32 = arith.constant 0 : i32
    %c0_i32_0 = arith.constant 0 : i32
    %c0_i32_1 = arith.constant 0 : i32
    return %c0_i32, %c0_i32_0 : i32, i32
  }
  func.func @transform_7(%arg0: i32) -> (i32, i32) {
    %c0_i32 = arith.constant 0 : i32
    %c0_i32_0 = arith.constant 0 : i32
    return %c0_i32, %arg0 : i32, i32
  }
}

</mosaic_0001>

<llo_original>
// kernel: tpu_custom_call.1
$region0: #{tpu_custom_call.1}
  #allocation0 [shape = 'u32[]', space=smem, size = 0x4, offset = 0x4, fixed_abs, tag = 'smem constant byte address 0x4 - core index']
  #allocation1 [shape = 'u32[72,128]{1,0:T(1,128)}', space=vmem, size = 0x9000, scoped, tag = 'internal scratch']
  %s0 = inlined_call_operand.vmem [shape: f32[4,512], index: 0, kind: input, shape index: {}]
  %s1 = inlined_call_operand.vmem [shape: bf16[8,4], index: 1, kind: input, shape index: {}]
  %s2 = inlined_call_operand.vmem [shape: f32[8,2], index: 2, kind: input, shape index: {}]
  %s3 = inlined_call_operand.hbm [shape: f32[8,9], index: 3, kind: input, shape index: {}]
  %s4 = inlined_call_operand.hbm [shape: f32[8,512], index: 4, kind: input, shape index: {}]
  %s5 = inlined_call_operand.vmem [shape: bf16[4,8], index: 5, kind: input, shape index: {}]
  %s6 = inlined_call_operand.vmem [shape: f32[4,1], index: 6, kind: input, shape index: {}]
  %s7 = inlined_call_operand.hbm [shape: f32[4,512], index: 7, kind: output, shape index: {}]
  %s8 = sld [smem:[#allocation0]]
  $region46: #{tpu_custom_call.1} parent=0
    _
  %s10 = ssub.s32 1, %s8
  %s11 = scalar_select 0, %s10, %s8
  $region1: #{tpu_custom_call.1} parent=0
    #allocation2 [shape = 'u8[4096]{0}', space=vmem, size = 0x1000, scoped, tag = 'input window, operand 3, single buffered']
    #allocation3 [shape = 's32[1]{0}', space=sflag, size = 0x4, scoped, tag = 'scoped memory for tpu_custom_call.1']
    #allocation4 [shape = 's32[1]{0}', space=sflag, size = 0x4, scoped, tag = 'scoped memory for tpu_custom_call.1']
    #allocation5 [shape = 'u8[16384]{0}', space=vmem, size = 0x4000, scoped, tag = 'input window, operand 4, single buffered']
    #allocation6 [shape = 's32[1]{0}', space=sflag, size = 0x4, scoped, tag = 'scoped memory for tpu_custom_call.1']
    #allocation7 [shape = 'u8[8192]{0}', space=vmem, size = 0x2000, scoped, tag = 'output window, operand 0, single buffered']
    %12 = vsyncpa [#allocation3], 0
    %13 = vsyncpa [#allocation6], 0
    %14 = vsyncpa [#allocation4], 0
    // Predicated region
    $region2: #{tpu_custom_call.1} parent=1 // pred_check
      _
    $region3: #{tpu_custom_call.1} parent=1 // pred_check_branch
      %16 = sbr.rel (0) target = $region5
    $region4: #{tpu_custom_call.1} parent=1 // pred_region
      _
    $region5: #{tpu_custom_call.1} parent=1 // pred_fallthru
      _
    // Predicated region
    $region6: #{tpu_custom_call.1} parent=1 // pred_check
      _
    $region7: #{tpu_custom_call.1} parent=1 // pred_check_branch
      %18 = sbr.rel (0) target = $region9
    $region8: #{tpu_custom_call.1} parent=1 // pred_region
      _
    $region9: #{tpu_custom_call.1} parent=1 // pred_fallthru
      _
    // Predicated region
    $region10: #{tpu_custom_call.1} parent=1 // pred_check
      _
    $region11: #{tpu_custom_call.1} parent=1 // pred_check_branch
      %20 = sbr.rel (0) target = $region13
    $region12: #{tpu_custom_call.1} parent=1 // pred_region
      _
    $region13: #{tpu_custom_call.1} parent=1 // pred_fallthru
      _
    // Predicated region
    $region14: #{tpu_custom_call.1} parent=1 // pred_check
      _
    $region15: #{tpu_custom_call.1} parent=1 // pred_check_branch
      %22 = sbr.rel (0) target = $region17
    $region16: #{tpu_custom_call.1} parent=1 // pred_region
      %24 = vsyncadd [#allocation3], 0
      %s26 = sshll.u32 %s3, 4
      %s27 = int_to_ptr.hbm [resolvable:$true] %s26
      %s28 = sshll.u32 [#allocation2], 4
      %s29 = int_to_ptr.vmem [resolvable:$true] %s28
      %31 = dma.hbm_to_vmem [thread:$0]  %s27, 128, %s29, [#allocation3]
    $region17: #{tpu_custom_call.1} parent=1 // pred_fallthru
      _
    // Predicated region
    $region18: #{tpu_custom_call.1} parent=1 // pred_check
      _
    $region19: #{tpu_custom_call.1} parent=1 // pred_check_branch
      %33 = sbr.rel (0) target = $region21
    $region20: #{tpu_custom_call.1} parent=1 // pred_region
      %35 = vsyncadd [#allocation6], 0
      %s37 = sshll.u32 %s4, 4
      %s38 = int_to_ptr.hbm [resolvable:$true] %s37
      %s39 = sshll.u32 [#allocation5], 4
      %s40 = int_to_ptr.vmem [resolvable:$true] %s39
      %42 = dma.hbm_to_vmem [thread:$0]  %s38, 512, %s40, [#allocation6]
    $region21: #{tpu_custom_call.1} parent=1 // pred_fallthru
      _
    // Predicated region
    $region22: #{tpu_custom_call.1} parent=1 // pred_check
      _
    $region23: #{tpu_custom_call.1} parent=1 // pred_check_branch
      %44 = sbr.rel (0) target = $region25
    $region24: #{tpu_custom_call.1} parent=1 // pred_region
      _
    $region25: #{tpu_custom_call.1} parent=1 // pred_fallthru
      _
    // Predicated region
    $region26: #{tpu_custom_call.1} parent=1 // pred_check
      _
    $region27: #{tpu_custom_call.1} parent=1 // pred_check_branch
      %46 = sbr.rel (0) target = $region29
    $region28: #{tpu_custom_call.1} parent=1 // pred_region
      _
    $region29: #{tpu_custom_call.1} parent=1 // pred_fallthru
      _
    // Predicated region
    $region30: #{tpu_custom_call.1} parent=1 // pred_check
      _
    $region31: #{tpu_custom_call.1} parent=1 // pred_check_branch
      %48 = sbr.rel (0) target = $region33
    $region32: #{tpu_custom_call.1} parent=1 // pred_region
      %50 = dma.done [#allocation3], 128
    $region33: #{tpu_custom_call.1} parent=1 // pred_fallthru
      _
    // Predicated region
    $region34: #{tpu_custom_call.1} parent=1 // pred_check
      _
    $region35: #{tpu_custom_call.1} parent=1 // pred_check_branch
      %52 = sbr.rel (0) target = $region37
    $region36: #{tpu_custom_call.1} parent=1 // pred_region
      %54 = dma.done [#allocation6], 512
    $region37: #{tpu_custom_call.1} parent=1 // pred_fallthru
      _
    %v56 = vld [vmem:[%s0] sm:$0xff]
    %v57 = vld [vmem:[%s0 + $0x8] sm:$0xff]
    %60 = vst [vmem:[#allocation1] ss:$2 sm:$0xff] %v56
    %s61 = scalar_lea.vmem [#allocation1], 16
    %62 = vst [vmem:[%s61] ss:$2 sm:$0xff] %v57
    %v63 = vld.sshfl [vmem:[#allocation1] sm:$0xff pattern:$0x75316420]
    %v64 = vld.sshfl [vmem:[#allocation1 + $0x8] sm:$0xff pattern:$0x75316420]
    %v65 = vld.sshfl [vmem:[#allocation1 + $0x10] sm:$0xff pattern:$0x75316420]
    %v66 = vld.sshfl [vmem:[#allocation1 + $0x18] sm:$0xff pattern:$0x75316420]
    %v71 = vpack.c.bf16 %v63, %v63
    %v72 = vpack.c.bf16 %v64, %v64
    %v73 = vpack.c.bf16 %v65, %v65
    %v74 = vpack.c.bf16 %v66, %v66
    %v75 = vld [vmem:[%s1] sm:$0xf]
    %v76 = vld [vmem:[%s2] sm:$0xff]
    %78 = vset.pattern.permute.xlu0 0
    %79 = vperm.xlu0 %78, %v76
    %v80 = vpop.permute.xlu0 %79
    %vm82 = vcmask 31744
    %v84 = vsel %vm82, %v75, 0
    %vm86 = vcmask 1041408
    %v88 = vsel %vm86, %v71, 0
    %v91 = vsel %vm86, %v72, 0
    %v94 = vsel %vm86, %v73, 0
    %v97 = vsel %vm86, %v74, 0
    %99 = vmatpush.bf16.msra.mxu0 0
    %100 = vmatpush.bf16.msra.mxu0 0
    %101 = vmatpush.bf16.msra.mxu0 0
    %102 = vmatpush.bf16.msra.mxu0 0
    %103 = vmatpush.bf16.msra.mxu0 0
    %104 = vmatpush.bf16.msra.mxu0 0
    %105 = vmatpush.bf16.msra.mxu0 0
    %106 = vmatpush.bf16.msra.mxu0 %v88
    %107 = vmatmul.bf16.gmra.mxu0 %v84
    %v108 = vpop.f32.mrf.mxu0
    %v109 = vadd.f32 %v80, %v108
    %v110 = vpop.f32.mrf.mxu0
    %111 = vdwg.mxu0
    %112 = vmatpush.bf16.msra.mxu0 0
    %113 = vmatpush.bf16.msra.mxu0 0
    %114 = vmatpush.bf16.msra.mxu0 0
    %115 = vmatpush.bf16.msra.mxu0 0
    %116 = vmatpush.bf16.msra.mxu0 0
    %117 = vmatpush.bf16.msra.mxu0 0
    %118 = vmatpush.bf16.msra.mxu0 0
    %119 = vmatpush.bf16.msra.mxu0 %v91
    %120 = vmatmul.bf16.gmra.mxu0 %v84
    %v121 = vpop.f32.mrf.mxu0
    %v122 = vadd.f32 %v80, %v121
    %v123 = vpop.f32.mrf.mxu0
    %124 = vdwg.mxu0
    %125 = vmatpush.bf16.msra.mxu0 0
    %126 = vmatpush.bf16.msra.mxu0 0
    %127 = vmatpush.bf16.msra.mxu0 0
    %128 = vmatpush.bf16.msra.mxu0 0
    %129 = vmatpush.bf16.msra.mxu0 0
    %130 = vmatpush.bf16.msra.mxu0 0
    %131 = vmatpush.bf16.msra.mxu0 0
    %132 = vmatpush.bf16.msra.mxu0 %v94
    %133 = vmatmul.bf16.gmra.mxu0 %v84
    %v134 = vpop.f32.mrf.mxu0
    %v135 = vadd.f32 %v80, %v134
    %v136 = vpop.f32.mrf.mxu0
    %137 = vdwg.mxu0
    %138 = vmatpush.bf16.msra.mxu0 0
    %139 = vmatpush.bf16.msra.mxu0 0
    %140 = vmatpush.bf16.msra.mxu0 0
    %141 = vmatpush.bf16.msra.mxu0 0
    %142 = vmatpush.bf16.msra.mxu0 0
    %143 = vmatpush.bf16.msra.mxu0 0
    %144 = vmatpush.bf16.msra.mxu0 0
    %145 = vmatpush.bf16.msra.mxu0 %v97
    %146 = vmatmul.bf16.gmra.mxu0 %v84
    %v147 = vpop.f32.mrf.mxu0
    %v148 = vadd.f32 %v80, %v147
    %v149 = vpop.f32.mrf.mxu0
    %150 = vdwg.mxu0
    %v151 = vmax.f32 %v109, 0.0
    %v152 = vmax.f32 %v122, 0.0
    %v153 = vmax.f32 %v135, 0.0
    %v154 = vmax.f32 %v148, 0.0
    %v155 = vld [vmem:[#allocation2] sm:$0xff]
    %157 = vset.pattern.permute.xlu0 4
    %158 = vperm.xlu0 %157, %v155
    %v159 = vpop.permute.xlu0 %158
    %v161 = vmul.f32 %v151, %v159
    %v162 = vmul.f32 %v152, %v159
    %v163 = vmul.f32 %v153, %v159
    %v164 = vmul.f32 %v154, %v159
    %165 = vrot.lane.b32.xlu0 %v151, 17
    %v166 = vpop.permute.xlu0 %165
    %167 = vrot.lane.b32.xlu0 %v152, 17
    %v168 = vpop.permute.xlu0 %167
    %169 = vrot.lane.b32.xlu0 %v153, 17
    %v170 = vpop.permute.xlu0 %169
    %171 = vrot.lane.b32.xlu0 %v154, 17
    %v172 = vpop.permute.xlu0 %171
    %v173 = vlaneseq
    %v174 = vand.u32 %v173, 127
    %vm175 = vcmp.lt.s32.totalorder %v174, 17
    %v176 = vsel %vm175, %v170, %v172
    %v177 = vsel %vm175, %v168, %v170
    %v178 = vsel %vm175, %v166, %v168
    %v179 = vsel %vm175, %v172, %v166
    %v180 = vld [vmem:[#allocation5] ss:$8 sm:$0xf]
    %v182 = vperm.slane %v180, 0
    %v183 = vperm.slane %v180, 1
    %v184 = vperm.slane %v180, 2
    %v185 = vperm.slane %v180, 3
    %v190 = vmul.f32 %v179, %v182
    %v191 = vmul.f32 %v178, %v183
    %v192 = vmul.f32 %v177, %v184
    %v193 = vmul.f32 %v176, %v185
    %194 = vset.pattern.permute.xlu0 0
    %195 = vperm.xlu0 %194, %v155
    %v196 = vpop.permute.xlu0 %195
    %v198 = vmul.f32 %v190, %v196
    %v199 = vmul.f32 %v191, %v196
    %v200 = vmul.f32 %v192, %v196
    %v201 = vmul.f32 %v193, %v196
    %v202 = vadd.f32 %v161, %v198
    %v203 = vadd.f32 %v162, %v199
    %v204 = vadd.f32 %v163, %v200
    %v205 = vadd.f32 %v164, %v201
    %206 = vrot.lane.b32.xlu0 %v151, 16
    %v207 = vpop.permute.xlu0 %206
    %208 = vrot.lane.b32.xlu0 %v152, 16
    %v209 = vpop.permute.xlu0 %208
    %210 = vrot.lane.b32.xlu0 %v153, 16
    %v211 = vpop.permute.xlu0 %210
    %212 = vrot.lane.b32.xlu0 %v154, 16
    %v213 = vpop.permute.xlu0 %212
    %vm214 = vcmp.lt.s32.totalorder %v174, 16
    %v215 = vsel %vm214, %v211, %v213
    %v216 = vsel %vm214, %v209, %v211
    %v217 = vsel %vm214, %v207, %v209
    %v218 = vsel %vm214, %v213, %v207
    %s219 = scalar_lea.vmem [#allocation5], 1
    %v220 = vld [vmem:[%s219] ss:$8 sm:$0xf]
    %v222 = vperm.slane %v220, 0
    %v223 = vperm.slane %v220, 1
    %v224 = vperm.slane %v220, 2
    %v225 = vperm.slane %v220, 3
    %v230 = vmul.f32 %v218, %v222
    %v231 = vmul.f32 %v217, %v223
    %v232 = vmul.f32 %v216, %v224
    %v233 = vmul.f32 %v215, %v225
    %234 = vset.pattern.permute.xlu0 1
    %235 = vperm.xlu0 %234, %v155
    %v236 = vpop.permute.xlu0 %235
    %v238 = vmul.f32 %v230, %v236
    %v239 = vmul.f32 %v231, %v236
    %v240 = vmul.f32 %v232, %v236
    %v241 = vmul.f32 %v233, %v236
    %v242 = vadd.f32 %v202, %v238
    %v243 = vadd.f32 %v203, %v239
    %v244 = vadd.f32 %v204, %v240
    %v245 = vadd.f32 %v205, %v241
    %246 = vrot.lane.b32.xlu0 %v151, 15
    %v247 = vpop.permute.xlu0 %246
    %248 = vrot.lane.b32.xlu0 %v152, 15
    %v249 = vpop.permute.xlu0 %248
    %250 = vrot.lane.b32.xlu0 %v153, 15
    %v251 = vpop.permute.xlu0 %250
    %252 = vrot.lane.b32.xlu0 %v154, 15
    %v253 = vpop.permute.xlu0 %252
    %vm254 = vcmp.lt.s32.totalorder %v174, 15
    %v255 = vsel %vm254, %v251, %v253
    %v256 = vsel %vm254, %v249, %v251
    %v257 = vsel %vm254, %v247, %v249
    %v258 = vsel %vm254, %v253, %v247
    %s259 = scalar_lea.vmem [#allocation5], 2
    %v260 = vld [vmem:[%s259] ss:$8 sm:$0xf]
    %v262 = vperm.slane %v260, 0
    %v263 = vperm.slane %v260, 1
    %v264 = vperm.slane %v260, 2
    %v265 = vperm.slane %v260, 3
    %v270 = vmul.f32 %v258, %v262
    %v271 = vmul.f32 %v257, %v263
    %v272 = vmul.f32 %v256, %v264
    %v273 = vmul.f32 %v255, %v265
    %274 = vset.pattern.permute.xlu0 2
    %275 = vperm.xlu0 %274, %v155
    %v276 = vpop.permute.xlu0 %275
    %v278 = vmul.f32 %v270, %v276
    %v279 = vmul.f32 %v271, %v276
    %v280 = vmul.f32 %v272, %v276
    %v281 = vmul.f32 %v273, %v276
    %v282 = vadd.f32 %v242, %v278
    %v283 = vadd.f32 %v243, %v279
    %v284 = vadd.f32 %v244, %v280
    %v285 = vadd.f32 %v245, %v281
    %286 = vrot.lane.b32.xlu0 %v151, 1
    %v287 = vpop.permute.xlu0 %286
    %288 = vrot.lane.b32.xlu0 %v152, 1
    %v289 = vpop.permute.xlu0 %288
    %290 = vrot.lane.b32.xlu0 %v153, 1
    %v291 = vpop.permute.xlu0 %290
    %292 = vrot.lane.b32.xlu0 %v154, 1
    %v293 = vpop.permute.xlu0 %292
    %vm294 = vcmp.lt.s32.totalorder %v174, 1
    %v295 = vsel %vm294, %v291, %v293
    %v296 = vsel %vm294, %v289, %v291
    %v297 = vsel %vm294, %v287, %v289
    %v298 = vsel %vm294, %v293, %v287
    %s299 = scalar_lea.vmem [#allocation5], 3
    %v300 = vld [vmem:[%s299] ss:$8 sm:$0xf]
    %v302 = vperm.slane %v300, 0
    %v303 = vperm.slane %v300, 1
    %v304 = vperm.slane %v300, 2
    %v305 = vperm.slane %v300, 3
    %v310 = vmul.f32 %v298, %v302
    %v311 = vmul.f32 %v297, %v303
    %v312 = vmul.f32 %v296, %v304
    %v313 = vmul.f32 %v295, %v305
    %314 = vset.pattern.permute.xlu0 3
    %315 = vperm.xlu0 %314, %v155
    %v316 = vpop.permute.xlu0 %315
    %v318 = vmul.f32 %v310, %v316
    %v319 = vmul.f32 %v311, %v316
    %v320 = vmul.f32 %v312, %v316
    %v321 = vmul.f32 %v313, %v316
    %v322 = vadd.f32 %v282, %v318
    %v323 = vadd.f32 %v283, %v319
    %v324 = vadd.f32 %v284, %v320
    %v325 = vadd.f32 %v285, %v321
    %326 = vrot.lane.b32.xlu0 %v151, 127
    %v327 = vpop.permute.xlu0 %326
    %328 = vrot.lane.b32.xlu0 %v152, 127
    %v329 = vpop.permute.xlu0 %328
    %330 = vrot.lane.b32.xlu0 %v153, 127
    %v331 = vpop.permute.xlu0 %330
    %332 = vrot.lane.b32.xlu0 %v154, 127
    %v333 = vpop.permute.xlu0 %332
    %vm334 = vcmp.lt.s32.totalorder %v174, 127
    %v335 = vsel %vm334, %v331, %v333
    %v336 = vsel %vm334, %v329, %v331
    %v337 = vsel %vm334, %v327, %v329
    %v338 = vsel %vm334, %v333, %v327
    %s339 = scalar_lea.vmem [#allocation5], 4
    %v340 = vld [vmem:[%s339] ss:$8 sm:$0xf]
    %v342 = vperm.slane %v340, 0
    %v343 = vperm.slane %v340, 1
    %v344 = vperm.slane %v340, 2
    %v345 = vperm.slane %v340, 3
    %v350 = vmul.f32 %v337, %v342
    %v351 = vmul.f32 %v336, %v343
    %v352 = vmul.f32 %v335, %v344
    %v353 = vmul.f32 %v338, %v345
    %354 = vset.pattern.permute.xlu0 5
    %355 = vperm.xlu0 %354, %v155
    %v356 = vpop.permute.xlu0 %355
    %v358 = vmul.f32 %v350, %v356
    %v359 = vmul.f32 %v351, %v356
    %v360 = vmul.f32 %v352, %v356
    %v361 = vmul.f32 %v353, %v356
    %v362 = vadd.f32 %v322, %v358
    %v363 = vadd.f32 %v323, %v359
    %v364 = vadd.f32 %v324, %v360
    %v365 = vadd.f32 %v325, %v361
    %366 = vrot.lane.b32.xlu0 %v151, 113
    %v367 = vpop.permute.xlu0 %366
    %368 = vrot.lane.b32.xlu0 %v152, 113
    %v369 = vpop.permute.xlu0 %368
    %370 = vrot.lane.b32.xlu0 %v153, 113
    %v371 = vpop.permute.xlu0 %370
    %372 = vrot.lane.b32.xlu0 %v154, 113
    %v373 = vpop.permute.xlu0 %372
    %vm374 = vcmp.lt.s32.totalorder %v174, 113
    %v375 = vsel %vm374, %v371, %v373
    %v376 = vsel %vm374, %v369, %v371
    %v377 = vsel %vm374, %v367, %v369
    %v378 = vsel %vm374, %v373, %v367
    %s379 = scalar_lea.vmem [#allocation5], 5
    %v380 = vld [vmem:[%s379] ss:$8 sm:$0xf]
    %v382 = vperm.slane %v380, 0
    %v383 = vperm.slane %v380, 1
    %v384 = vperm.slane %v380, 2
    %v385 = vperm.slane %v380, 3
    %v390 = vmul.f32 %v377, %v382
    %v391 = vmul.f32 %v376, %v383
    %v392 = vmul.f32 %v375, %v384
    %v393 = vmul.f32 %v378, %v385
    %394 = vset.pattern.permute.xlu0 6
    %395 = vperm.xlu0 %394, %v155
    %v396 = vpop.permute.xlu0 %395
    %v398 = vmul.f32 %v390, %v396
    %v399 = vmul.f32 %v391, %v396
    %v400 = vmul.f32 %v392, %v396
    %v401 = vmul.f32 %v393, %v396
    %v402 = vadd.f32 %v362, %v398
    %v403 = vadd.f32 %v363, %v399
    %v404 = vadd.f32 %v364, %v400
    %v405 = vadd.f32 %v365, %v401
    %406 = vrot.lane.b32.xlu0 %v151, 112
    %v407 = vpop.permute.xlu0 %406
    %408 = vrot.lane.b32.xlu0 %v152, 112
    %v409 = vpop.permute.xlu0 %408
    %410 = vrot.lane.b32.xlu0 %v153, 112
    %v411 = vpop.permute.xlu0 %410
    %412 = vrot.lane.b32.xlu0 %v154, 112
    %v413 = vpop.permute.xlu0 %412
    %vm414 = vcmp.lt.s32.totalorder %v174, 112
    %v415 = vsel %vm414, %v411, %v413
    %v416 = vsel %vm414, %v409, %v411
    %v417 = vsel %vm414, %v407, %v409
    %v418 = vsel %vm414, %v413, %v407
    %s419 = scalar_lea.vmem [#allocation5], 6
    %v420 = vld [vmem:[%s419] ss:$8 sm:$0xf]
    %v422 = vperm.slane %v420, 0
    %v423 = vperm.slane %v420, 1
    %v424 = vperm.slane %v420, 2
    %v425 = vperm.slane %v420, 3
    %v430 = vmul.f32 %v417, %v422
    %v431 = vmul.f32 %v416, %v423
    %v432 = vmul.f32 %v415, %v424
    %v433 = vmul.f32 %v418, %v425
    %434 = vset.pattern.permute.xlu0 7
    %435 = vperm.xlu0 %434, %v155
    %v436 = vpop.permute.xlu0 %435
    %v438 = vmul.f32 %v430, %v436
    %v439 = vmul.f32 %v431, %v436
    %v440 = vmul.f32 %v432, %v436
    %v441 = vmul.f32 %v433, %v436
    %v442 = vadd.f32 %v402, %v438
    %v443 = vadd.f32 %v403, %v439
    %v444 = vadd.f32 %v404, %v440
    %v445 = vadd.f32 %v405, %v441
    %446 = vrot.lane.b32.xlu0 %v151, 111
    %v447 = vpop.permute.xlu0 %446
    %448 = vrot.lane.b32.xlu0 %v152, 111
    %v449 = vpop.permute.xlu0 %448
    %450 = vrot.lane.b32.xlu0 %v153, 111
    %v451 = vpop.permute.xlu0 %450
    %452 = vrot.lane.b32.xlu0 %v154, 111
    %v453 = vpop.permute.xlu0 %452
    %vm454 = vcmp.lt.s32.totalorder %v174, 111
    %v455 = vsel %vm454, %v451, %v453
    %v456 = vsel %vm454, %v449, %v451
    %v457 = vsel %vm454, %v447, %v449
    %v458 = vsel %vm454, %v453, %v447
    %s459 = scalar_lea.vmem [#allocation5], 7
    %v460 = vld [vmem:[%s459] ss:$8 sm:$0xf]
    %v462 = vperm.slane %v460, 0
    %v463 = vperm.slane %v460, 1
    %v464 = vperm.slane %v460, 2
    %v465 = vperm.slane %v460, 3
    %v470 = vmul.f32 %v457, %v462
    %v471 = vmul.f32 %v456, %v463
    %v472 = vmul.f32 %v455, %v464
    %v473 = vmul.f32 %v458, %v465
    %474 = vset.pattern.permute.xlu0 8
    %475 = vperm.xlu0 %474, %v155
    %v476 = vpop.permute.xlu0 %475
    %v478 = vmul.f32 %v470, %v476
    %v479 = vmul.f32 %v471, %v476
    %v480 = vmul.f32 %v472, %v476
    %v481 = vmul.f32 %v473, %v476
    %v482 = vadd.f32 %v442, %v478
    %v483 = vadd.f32 %v443, %v479
    %v484 = vadd.f32 %v444, %v480
    %v485 = vadd.f32 %v445, %v481
    %486 = vset.pattern.permute.xlu0 1
    %487 = vperm.xlu0 %486, %v76
    %v488 = vpop.permute.xlu0 %487
    %v490 = vadd.f32 %v482, %v488
    %v491 = vadd.f32 %v483, %v488
    %v492 = vadd.f32 %v484, %v488
    %v493 = vadd.f32 %v485, %v488
    %v494 = vmax.f32 %v490, 0.0
    %v495 = vmax.f32 %v491, 0.0
    %v496 = vmax.f32 %v492, 0.0
    %v497 = vmax.f32 %v493, 0.0
    %v498 = vpack.c.bf16 %v494, %v494
    %v499 = vpack.c.bf16 %v495, %v495
    %v500 = vpack.c.bf16 %v496, %v496
    %v501 = vpack.c.bf16 %v497, %v497
    %v502 = vld [vmem:[%s5] sm:$0x3]
    %v503 = vld [vmem:[%s6] sm:$0xf]
    %505 = vset.pattern.permute.xlu0 0
    %506 = vperm.xlu0 %505, %v503
    %v507 = vpop.permute.xlu0 %506
    %vm509 = vcmask 64512
    %v511 = vsel %vm509, %v502, 0
    %vm513 = vcmask 1043456
    %v515 = vsel %vm513, %v498, 0
    %v518 = vsel %vm513, %v499, 0
    %v521 = vsel %vm513, %v500, 0
    %v524 = vsel %vm513, %v501, 0
    %526 = vmatpush.bf16.msra.mxu0 0
    %527 = vmatpush.bf16.msra.mxu0 0
    %528 = vmatpush.bf16.msra.mxu0 0
    %529 = vmatpush.bf16.msra.mxu0 0
    %530 = vmatpush.bf16.msra.mxu0 0
    %531 = vmatpush.bf16.msra.mxu0 0
    %532 = vmatpush.bf16.msra.mxu0 0
    %533 = vmatpush.bf16.msra.mxu0 %v515
    %534 = vmatmul.bf16.gmra.mxu0 %v511
    %v535 = vpop.f32.mrf.mxu0
    %v536 = vadd.f32 %v507, %v535
    %v537 = vpop.f32.mrf.mxu0
    %538 = vdwg.mxu0
    %539 = vmatpush.bf16.msra.mxu0 0
    %540 = vmatpush.bf16.msra.mxu0 0
    %541 = vmatpush.bf16.msra.mxu0 0
    %542 = vmatpush.bf16.msra.mxu0 0
    %543 = vmatpush.bf16.msra.mxu0 0
    %544 = vmatpush.bf16.msra.mxu0 0
    %545 = vmatpush.bf16.msra.mxu0 0
    %546 = vmatpush.bf16.msra.mxu0 %v518
    %547 = vmatmul.bf16.gmra.mxu0 %v511
    %v548 = vpop.f32.mrf.mxu0
    %v549 = vadd.f32 %v507, %v548
    %v550 = vpop.f32.mrf.mxu0
    %551 = vdwg.mxu0
    %552 = vmatpush.bf16.msra.mxu0 0
    %553 = vmatpush.bf16.msra.mxu0 0
    %554 = vmatpush.bf16.msra.mxu0 0
    %555 = vmatpush.bf16.msra.mxu0 0
    %556 = vmatpush.bf16.msra.mxu0 0
    %557 = vmatpush.bf16.msra.mxu0 0
    %558 = vmatpush.bf16.msra.mxu0 0
    %559 = vmatpush.bf16.msra.mxu0 %v521
    %560 = vmatmul.bf16.gmra.mxu0 %v511
    %v561 = vpop.f32.mrf.mxu0
    %v562 = vadd.f32 %v507, %v561
    %v563 = vpop.f32.mrf.mxu0
    %564 = vdwg.mxu0
    %565 = vmatpush.bf16.msra.mxu0 0
    %566 = vmatpush.bf16.msra.mxu0 0
    %567 = vmatpush.bf16.msra.mxu0 0
    %568 = vmatpush.bf16.msra.mxu0 0
    %569 = vmatpush.bf16.msra.mxu0 0
    %570 = vmatpush.bf16.msra.mxu0 0
    %571 = vmatpush.bf16.msra.mxu0 0
    %572 = vmatpush.bf16.msra.mxu0 %v524
    %573 = vmatmul.bf16.gmra.mxu0 %v511
    %v574 = vpop.f32.mrf.mxu0
    %v575 = vadd.f32 %v507, %v574
    %v576 = vpop.f32.mrf.mxu0
    %577 = vdwg.mxu0
    %578 = vst [vmem:[#allocation1] ss:$2 sm:$0xff] %v56
    %s579 = scalar_lea.vmem [#allocation1], 16
    %580 = vst [vmem:[%s579] ss:$2 sm:$0xff] %v57
    %v581 = vld.sshfl [vmem:[#allocation1] sm:$0xff pattern:$0x75316420]
    %v582 = vld.sshfl [vmem:[#allocation1 + $0x8] sm:$0xff pattern:$0x75316420]
    %v583 = vld.sshfl [vmem:[#allocation1 + $0x10] sm:$0xff pattern:$0x75316420]
    %v584 = vld.sshfl [vmem:[#allocation1 + $0x18] sm:$0xff pattern:$0x75316420]
    %v589 = vadd.f32 %v536, %v581
    %v590 = vadd.f32 %v549, %v582
    %v591 = vadd.f32 %v562, %v583
    %v592 = vadd.f32 %v575, %v584
    %v597 = vrot.slane %v590, 4
    %v598 = vrot.slane %v592, 4
    %v599 = vsel %vm513, %v589, %v597
    %v600 = vsel %vm513, %v591, %v598
    %603 = vst [vmem:[#allocation7] sm:$0xff] %v599
    %604 = vst [vmem:[#allocation7 + $0x8] sm:$0xff] %v600
    // Predicated region
    $region38: #{tpu_custom_call.1} parent=1 // pred_check
      _
    $region39: #{tpu_custom_call.1} parent=1 // pred_check_branch
      %606 = sbr.rel (0) target = $region41
    $region40: #{tpu_custom_call.1} parent=1 // pred_region
      %608 = vsyncadd [#allocation4], 0
      %s610 = sshll.u32 [#allocation7], 4
      %s611 = int_to_ptr.vmem [resolvable:$true] %s610
      %s612 = sshll.u32 %s7, 4
      %s613 = int_to_ptr.hbm [resolvable:$true] %s612
      %615 = dma.vmem_to_hbm [thread:$0]  %s611, 256, %s613, [#allocation4]
    $region41: #{tpu_custom_call.1} parent=1 // pred_fallthru
      _
    // Predicated region
    $region42: #{tpu_custom_call.1} parent=1 // pred_check
      _
    $region43: #{tpu_custom_call.1} parent=1 // pred_check_branch
      %617 = sbr.rel (0) target = $region45
    $region44: #{tpu_custom_call.1} parent=1 // pred_region
      %619 = dma.done [#allocation4], 256
    $region45: #{tpu_custom_call.1} parent=1 // pred_fallthru
      _
    %620 = vsyncpa [#allocation3], 1
    %621 = vsyncpa [#allocation6], 1
    %622 = vsyncpa [#allocation4], 1

</llo_original>
